<compile_context>
chip_gen: v6e
topology: v6e:2x2x1
jax: 0.10.0
libtpu: 0.0.40
codegen_flags: <defaults>
</compile_context>

<pallas_src>
import functools
import math

import jax
import jax.numpy as jnp
from jax.experimental import pallas as pl
from jax.experimental.pallas import tpu as pltpu


def _lprojector_kernel(x_ref, w_ref, b_ref, o_ref, *, slope):
    # x_ref: (TS, d, n)   -- TS samples, already transposed so n is the lane axis
    # w_ref: (n, k_pad)   -- resident across the grid
    # b_ref: (d, k_pad)   -- resident across the grid
    # o_ref: (TS, d, k_pad)
    ts, d, n = x_ref.shape
    k_pad = w_ref.shape[1]

    # Collapse (TS, d) into one M axis (d is a multiple of 8 in typical BiHDM
    # configs, so this reshape is a free relayout) and run one MXU matmul for
    # the whole tile: (TS*d, n) @ (n, k_pad) -> (TS*d, k_pad), f32 accumulate.
    x2 = x_ref[...].reshape(ts * d, n)
    ws = jnp.dot(x2, w_ref[...], preferred_element_type=jnp.float32)

    # LeakyReLU on the VPU, then broadcast-add the bias (once per tile).
    act = jnp.where(ws >= 0, ws, slope * ws)
    out = act.reshape(ts, d, k_pad) + b_ref[...].astype(jnp.float32)
    o_ref[...] = out.astype(o_ref.dtype)


def lprojector_forward(x, weight, bias, slope=0.01, *, samples_per_tile=None):
    """x: (s, n, d), weight: (n, k), bias: (d, k) -> (s, d, k)."""
    s, n, d = x.shape
    k = weight.shape[1]
    assert weight.shape == (n, k)
    assert bias.shape == (d, k)

    lane = 128
    k_pad = ((k + lane - 1) // lane) * lane

    # ---- layout plumbing in the wrapper (XLA), not inside the kernel ----
    # Transpose so the contraction axis n sits on the LHS lane axis.
    xt = jnp.transpose(x, (0, 2, 1))                       # (s, d, n)
    # Zero-pad k so the output block is lane-dense; padded cols are
    # LeakyReLU(0) + 0 = 0 and are sliced off below.
    w_p = jnp.pad(weight, ((0, 0), (0, k_pad - k)))        # (n, k_pad)
    b_p = jnp.pad(bias, ((0, 0), (0, k_pad - k)))          # (d, k_pad)

    # ---- tile-size selection: a few MB per step, fits all generations ----
    itemsize = jnp.dtype(x.dtype).itemsize
    bytes_per_sample = d * (n + k_pad) * itemsize
    if samples_per_tile is None:
        ts = max(1, min(s, (2 << 20) // max(1, bytes_per_sample)))
        # If one tile would swallow the whole batch but the batch is still
        # sizeable, split in two so v7x's second TensorCore has work.
        if ts >= s and s > 1 and s * bytes_per_sample > (1 << 19):
            ts = (s + 1) // 2
    else:
        ts = max(1, min(s, samples_per_tile))

    num_tiles = (s + ts - 1) // ts
    s_pad = num_tiles * ts
    if s_pad != s:
        xt = jnp.pad(xt, ((0, s_pad - s), (0, 0), (0, 0)))

    kernel = functools.partial(_lprojector_kernel, slope=slope)

    out = pl.pallas_call(
        kernel,
        out_shape=jax.ShapeDtypeStruct((s_pad, d, k_pad), x.dtype),
        grid_spec=pltpu.PrefetchScalarGridSpec(
            num_scalar_prefetch=0,
            grid=(num_tiles,),
            in_specs=[
                pl.BlockSpec((ts, d, n), lambda i: (i, 0, 0)),     # TS samples / step
                pl.BlockSpec((n, k_pad), lambda i: (0, 0)),        # weight: resident
                pl.BlockSpec((d, k_pad), lambda i: (0, 0)),        # bias: resident
            ],
            out_specs=pl.BlockSpec((ts, d, k_pad), lambda i: (i, 0, 0)),
        ),
        compiler_params=pltpu.CompilerParams(
            dimension_semantics=("parallel",),
        ),
    )(xt, w_p, b_p)

    # Drop sample padding and lane padding; reshape is pure metadata in XLA.
    return out[:s, :, :k]


def lprojector_reference(x, weight, bias, slope=0.01):
    ws = jnp.einsum('nk,snd->sdk', weight, x)
    act = jnp.where(ws >= 0, ws, slope * ws)
    return act + bias


if __name__ == "__main__":
    # Small shapes consistent with the module: s samples, n electrodes,
    # d global features, k projector nodes.
    s, n, d, k = 2, 8, 32, 16
    a = 0.01

    key = jax.random.PRNGKey(0)
    kx, kw, kb = jax.random.split(key, 3)

    # Deterministic in-script parameter init mirroring the PyTorch __init__:
    # kaiming_uniform_(weight, a=0.01, mode='fan_in', nonlinearity='leaky_relu')
    gain = math.sqrt(2.0 / (1.0 + a * a))
    w_bound = gain * math.sqrt(3.0 / n)           # fan_in = n (shape (n, k))
    weight = jax.random.uniform(kw, (n, k), jnp.float32, -w_bound, w_bound)
    # uniform_(bias, -1/sqrt(n), 1/sqrt(n))
    b_bound = 1.0 / math.sqrt(n)
    bias = jax.random.uniform(kb, (d, k), jnp.float32, -b_bound, b_bound)

    x = jax.random.normal(kx, (s, n, d), jnp.float32)

    out = lprojector_forward(x, weight, bias, slope=a)
    out = jax.block_until_ready(out)

    ref = lprojector_reference(x, weight, bias, slope=a)
    assert out.shape == (s, d, k)
    assert jnp.allclose(out, ref, atol=1e-5, rtol=1e-5), "mismatch vs reference"

    print("KERNEL_OK")
</pallas_src>

<mosaic_0001>
module attributes {stable_mosaic.version = 11 : i64} {
  func.func @_lprojector_kernel(%arg0: i32, %arg1: memref<2x32x8xf32, #tpu.memory_space<vmem>>, %arg2: memref<8x128xf32, #tpu.memory_space<vmem>>, %arg3: memref<32x128xf32, #tpu.memory_space<vmem>>, %arg4: memref<2x32x128xf32, #tpu.memory_space<vmem>>) attributes {dimension_semantics = [#tpu.dimension_semantics<parallel>], iteration_bounds = array<i64: 1>, scalar_prefetch = 0 : i64, scratch_operands = 0 : i64, tpu.core_type = #tpu.core_type<tc>, window_params = [{transform_indices = @transform_0, window_bounds = array<i64: 2, 32, 8>}, {pipeline_mode = #tpu.pipeline_mode<synchronous>, transform_indices = @transform_1, window_bounds = array<i64: 8, 128>}, {pipeline_mode = #tpu.pipeline_mode<synchronous>, transform_indices = @transform_2, window_bounds = array<i64: 32, 128>}, {transform_indices = @transform_3, window_bounds = array<i64: 2, 32, 128>}]} {
    %c0 = arith.constant 0 : index
    %c0_0 = arith.constant 0 : index
    %c0_1 = arith.constant 0 : index
    %0 = vector.load %arg1[%c0, %c0_0, %c0_1] : memref<2x32x8xf32, #tpu.memory_space<vmem>>, vector<2x32x8xf32>
    %1 = vector.shape_cast %0 : vector<2x32x8xf32> to vector<64x8xf32>
    %c0_2 = arith.constant 0 : index
    %c0_3 = arith.constant 0 : index
    %2 = vector.load %arg2[%c0_2, %c0_3] : memref<8x128xf32, #tpu.memory_space<vmem>>, vector<8x128xf32>
    %cst = arith.constant dense<0.000000e+00> : vector<64x128xf32>
    %3 = tpu.matmul %1, %2, %cst {dimension_numbers = #tpu.dot_dimension_numbers<[1], [0], [0], [1], [0, 0, 1, 1], [], []>} : vector<64x8xf32>, vector<8x128xf32>, vector<64x128xf32> -> vector<64x128xf32>
    %cst_4 = arith.constant 0.000000e+00 : f32
    %4 = vector.broadcast %cst_4 : f32 to vector<64x128xf32>
    %5 = arith.cmpf oge, %3, %4 : vector<64x128xf32>
    %cst_5 = arith.constant 0.00999999977 : f32
    %6 = vector.broadcast %cst_5 : f32 to vector<64x128xf32>
    %7 = arith.mulf %6, %3 : vector<64x128xf32>
    %8 = arith.select %5, %3, %7 : vector<64x128xi1>, vector<64x128xf32>
    %9 = vector.shape_cast %8 : vector<64x128xf32> to vector<2x32x128xf32>
    %c0_6 = arith.constant 0 : index
    %c0_7 = arith.constant 0 : index
    %10 = vector.load %arg3[%c0_6, %c0_7] : memref<32x128xf32, #tpu.memory_space<vmem>>, vector<32x128xf32>
    %11 = vector.shape_cast %10 : vector<32x128xf32> to vector<1x32x128xf32>
    %12 = vector.broadcast %11 : vector<1x32x128xf32> to vector<2x32x128xf32>
    %13 = arith.addf %9, %12 : vector<2x32x128xf32>
    %c0_8 = arith.constant 0 : index
    %c0_9 = arith.constant 0 : index
    %c0_10 = arith.constant 0 : index
    %14 = vector.load %arg4[%c0_8, %c0_9, %c0_10] : memref<2x32x128xf32, #tpu.memory_space<vmem>>, vector<2x32x128xf32>
    tpu.vector_store %arg4[%c0_8, %c0_9, %c0_10], %13 {strides = array<i32>} : memref<2x32x128xf32, #tpu.memory_space<vmem>>, vector<2x32x128xf32>,
    return
  }
  func.func @transform_0(%arg0: i32) -> (i32, i32, i32) {
    %c0_i32 = arith.constant 0 : i32
    %c0_i32_0 = arith.constant 0 : i32
    %c0_i32_1 = arith.constant 0 : i32
    return %arg0, %c0_i32, %c0_i32_0 : i32, i32, i32
  }
  func.func @transform_1(%arg0: i32) -> (i32, i32) {
    %c0_i32 = arith.constant 0 : i32
    %c0_i32_0 = arith.constant 0 : i32
    %c0_i32_1 = arith.constant 0 : i32
    return %c0_i32, %c0_i32_0 : i32, i32
  }
  func.func @transform_2(%arg0: i32) -> (i32, i32) {
    %c0_i32 = arith.constant 0 : i32
    %c0_i32_0 = arith.constant 0 : i32
    %c0_i32_1 = arith.constant 0 : i32
    return %c0_i32, %c0_i32_0 : i32, i32
  }
  func.func @transform_3(%arg0: i32) -> (i32, i32, i32) {
    %c0_i32 = arith.constant 0 : i32
    %c0_i32_0 = arith.constant 0 : i32
    %c0_i32_1 = arith.constant 0 : i32
    return %arg0, %c0_i32, %c0_i32_0 : i32, i32, i32
  }
}

</mosaic_0001>

<llo_original>
// kernel: tpu_custom_call.1
$region0: #{tpu_custom_call.1}
  #allocation0 [shape = 'u32[]', space=smem, size = 0x4, offset = 0x4, fixed_abs, tag = 'smem constant byte address 0x4 - core index']
  #allocation1 [shape = 'u32[144,128]{1,0:T(1,128)}', space=vmem, size = 0x12000, scoped, tag = 'internal scratch']
  %s0 = inlined_call_operand.vmem [shape: f32[2,32,8], index: 0, kind: input, shape index: {}]
  %s1 = inlined_call_operand.vmem [shape: f32[8,128], index: 1, kind: input, shape index: {}]
  %s2 = inlined_call_operand.vmem [shape: f32[32,128], index: 2, kind: input, shape index: {}]
  %s3 = inlined_call_operand.hbm [shape: f32[2,32,128], index: 3, kind: output, shape index: {}]
  %s4 = sld [smem:[#allocation0]]
  $region22: #{tpu_custom_call.1} parent=0
    _
  %s6 = ssub.s32 1, %s4
  %s7 = scalar_select 0, %s6, %s4
  $region1: #{tpu_custom_call.1} parent=0
    #allocation2 [shape = 'u8[32768]{0}', space=vmem, size = 0x8000, scoped, tag = 'output window, operand 0, single buffered']
    #allocation3 [shape = 's32[1]{0}', space=sflag, size = 0x4, scoped, tag = 'scoped memory for tpu_custom_call.1']
    %8 = vsyncpa [#allocation3], 0
    // Predicated region
    $region2: #{tpu_custom_call.1} parent=1 // pred_check
      _
    $region3: #{tpu_custom_call.1} parent=1 // pred_check_branch
      %10 = sbr.rel (0) target = $region5
    $region4: #{tpu_custom_call.1} parent=1 // pred_region
      _
    $region5: #{tpu_custom_call.1} parent=1 // pred_fallthru
      _
    // Predicated region
    $region6: #{tpu_custom_call.1} parent=1 // pred_check
      _
    $region7: #{tpu_custom_call.1} parent=1 // pred_check_branch
      %12 = sbr.rel (0) target = $region9
    $region8: #{tpu_custom_call.1} parent=1 // pred_region
      _
    $region9: #{tpu_custom_call.1} parent=1 // pred_fallthru
      _
    // Predicated region
    $region10: #{tpu_custom_call.1} parent=1 // pred_check
      _
    $region11: #{tpu_custom_call.1} parent=1 // pred_check_branch
      %14 = sbr.rel (0) target = $region13
    $region12: #{tpu_custom_call.1} parent=1 // pred_region
      _
    $region13: #{tpu_custom_call.1} parent=1 // pred_fallthru
      _
    %v15 = vld [vmem:[%s0] sm:$0xff]
    %v16 = vld [vmem:[%s0 + $0x8] sm:$0xff]
    %v17 = vld [vmem:[%s0 + $0x10] sm:$0xff]
    %v18 = vld [vmem:[%s0 + $0x18] sm:$0xff]
    %v19 = vld [vmem:[%s0 + $0x20] sm:$0xff]
    %v20 = vld [vmem:[%s0 + $0x28] sm:$0xff]
    %v21 = vld [vmem:[%s0 + $0x30] sm:$0xff]
    %v22 = vld [vmem:[%s0 + $0x38] sm:$0xff]
    %v23 = vld [vmem:[%s1] sm:$0xff]
    %vm24 = vcmask 64512
    %v26 = vsel %vm24, %v15, 0
    %v29 = vsel %vm24, %v16, 0
    %v32 = vsel %vm24, %v17, 0
    %v35 = vsel %vm24, %v18, 0
    %v38 = vsel %vm24, %v19, 0
    %v41 = vsel %vm24, %v20, 0
    %v44 = vsel %vm24, %v21, 0
    %v47 = vsel %vm24, %v22, 0
    %49 = vmatprep.subr.mxu0 0.0
    %50 = vmatpush1.msra.mxu0 0.0
    %51 = vmatprep.subr.mxu0 0.0
    %52 = vmatpush1.msra.mxu0 0.0
    %53 = vmatprep.subr.mxu0 0.0
    %54 = vmatpush1.msra.mxu0 0.0
    %55 = vmatprep.subr.mxu0 0.0
    %56 = vmatpush1.msra.mxu0 0.0
    %57 = vmatprep.subr.mxu0 0.0
    %58 = vmatpush1.msra.mxu0 0.0
    %59 = vmatprep.subr.mxu0 0.0
    %60 = vmatpush1.msra.mxu0 0.0
    %61 = vmatprep.subr.mxu0 0.0
    %62 = vmatpush1.msra.mxu0 0.0
    %63 = vmatprep.subr.mxu0 0.0
    %64 = vmatpush1.msra.mxu0 0.0
    %65 = vmatprep.subr.mxu0 0.0
    %66 = vmatpush1.msra.mxu0 0.0
    %67 = vmatprep.subr.mxu0 0.0
    %68 = vmatpush1.msra.mxu0 0.0
    %69 = vmatprep.subr.mxu0 0.0
    %70 = vmatpush1.msra.mxu0 0.0
    %71 = vmatprep.subr.mxu0 0.0
    %72 = vmatpush1.msra.mxu0 0.0
    %73 = vmatprep.subr.mxu0 0.0
    %74 = vmatpush1.msra.mxu0 0.0
    %75 = vmatprep.subr.mxu0 0.0
    %76 = vmatpush1.msra.mxu0 0.0
    %77 = vmatprep.subr.mxu0 0.0
    %78 = vmatpush1.msra.mxu0 0.0
    %79 = vmatprep.subr.mxu0 0.0
    %80 = vmatpush1.msra.mxu0 %v23
    %81 = vmatprep.subr.mxu0 0.0
    %82 = vmatpush2.msra.mxu0 0.0
    %83 = vmatprep.subr.mxu0 0.0
    %84 = vmatpush2.msra.mxu0 0.0
    %85 = vmatprep.subr.mxu0 0.0
    %86 = vmatpush2.msra.mxu0 0.0
    %87 = vmatprep.subr.mxu0 0.0
    %88 = vmatpush2.msra.mxu0 0.0
    %89 = vmatprep.subr.mxu0 0.0
    %90 = vmatpush2.msra.mxu0 0.0
    %91 = vmatprep.subr.mxu0 0.0
    %92 = vmatpush2.msra.mxu0 0.0
    %93 = vmatprep.subr.mxu0 0.0
    %94 = vmatpush2.msra.mxu0 0.0
    %95 = vmatprep.subr.mxu0 0.0
    %96 = vmatpush2.msra.mxu0 0.0
    %97 = vmatprep.subr.mxu0 0.0
    %98 = vmatpush2.msra.mxu0 0.0
    %99 = vmatprep.subr.mxu0 0.0
    %100 = vmatpush2.msra.mxu0 0.0
    %101 = vmatprep.subr.mxu0 0.0
    %102 = vmatpush2.msra.mxu0 0.0
    %103 = vmatprep.subr.mxu0 0.0
    %104 = vmatpush2.msra.mxu0 0.0
    %105 = vmatprep.subr.mxu0 0.0
    %106 = vmatpush2.msra.mxu0 0.0
    %107 = vmatprep.subr.mxu0 0.0
    %108 = vmatpush2.msra.mxu0 0.0
    %109 = vmatprep.subr.mxu0 0.0
    %110 = vmatpush2.msra.mxu0 0.0
    %111 = vmatprep.subr.mxu0 0.0
    %112 = vmatpush2.msra.mxu0 0.0
    %113 = vmatprep.mubr.f32.mxu0 0.0
    %114 = vmatmul.mubr.f32.gmra.mxu0 %v26
    %v115 = vpop.f32.mrf.mxu0
    %v116 = vadd.f32 0.0, %v115
    %v117 = vpop.f32.mrf.mxu0
    %118 = vmatprep.mubr.f32.mxu0 0.0
    %119 = vmatmul.mubr.f32.gmra.mxu0 %v29
    %v120 = vpop.f32.mrf.mxu0
    %v121 = vadd.f32 0.0, %v120
    %v122 = vpop.f32.mrf.mxu0
    %123 = vmatprep.mubr.f32.mxu0 0.0
    %124 = vmatmul.mubr.f32.gmra.mxu0 %v32
    %v125 = vpop.f32.mrf.mxu0
    %v126 = vadd.f32 0.0, %v125
    %v127 = vpop.f32.mrf.mxu0
    %128 = vmatprep.mubr.f32.mxu0 0.0
    %129 = vmatmul.mubr.f32.gmra.mxu0 %v35
    %v130 = vpop.f32.mrf.mxu0
    %v131 = vadd.f32 0.0, %v130
    %v132 = vpop.f32.mrf.mxu0
    %133 = vmatprep.mubr.f32.mxu0 0.0
    %134 = vmatmul.mubr.f32.gmra.mxu0 %v38
    %v135 = vpop.f32.mrf.mxu0
    %v136 = vadd.f32 0.0, %v135
    %v137 = vpop.f32.mrf.mxu0
    %138 = vmatprep.mubr.f32.mxu0 0.0
    %139 = vmatmul.mubr.f32.gmra.mxu0 %v41
    %v140 = vpop.f32.mrf.mxu0
    %v141 = vadd.f32 0.0, %v140
    %v142 = vpop.f32.mrf.mxu0
    %143 = vmatprep.mubr.f32.mxu0 0.0
    %144 = vmatmul.mubr.f32.gmra.mxu0 %v44
    %v145 = vpop.f32.mrf.mxu0
    %v146 = vadd.f32 0.0, %v145
    %v147 = vpop.f32.mrf.mxu0
    %148 = vmatprep.mubr.f32.mxu0 0.0
    %149 = vmatmul.mubr.f32.gmra.mxu0 %v47
    %v150 = vpop.f32.mrf.mxu0
    %v151 = vadd.f32 0.0, %v150
    %v152 = vpop.f32.mrf.mxu0
    %153 = vdwg.mxu0
    %vm154 = vcmp.ge.f32.partialorder %v116, 0.0
    %vm155 = vcmp.ge.f32.partialorder %v121, 0.0
    %vm156 = vcmp.ge.f32.partialorder %v126, 0.0
    %vm157 = vcmp.ge.f32.partialorder %v131, 0.0
    %vm158 = vcmp.ge.f32.partialorder %v136, 0.0
    %vm159 = vcmp.ge.f32.partialorder %v141, 0.0
    %vm160 = vcmp.ge.f32.partialorder %v146, 0.0
    %vm161 = vcmp.ge.f32.partialorder %v151, 0.0
    %v162 = vmul.f32 %v116, 0.01
    %v163 = vmul.f32 %v121, 0.01
    %v164 = vmul.f32 %v126, 0.01
    %v165 = vmul.f32 %v131, 0.01
    %v166 = vmul.f32 %v136, 0.01
    %v167 = vmul.f32 %v141, 0.01
    %v168 = vmul.f32 %v146, 0.01
    %v169 = vmul.f32 %v151, 0.01
    %v170 = vsel %vm154, %v116, %v162
    %v171 = vsel %vm155, %v121, %v163
    %v172 = vsel %vm156, %v126, %v164
    %v173 = vsel %vm157, %v131, %v165
    %v174 = vsel %vm158, %v136, %v166
    %v175 = vsel %vm159, %v141, %v167
    %v176 = vsel %vm160, %v146, %v168
    %v177 = vsel %vm161, %v151, %v169
    %v178 = vld [vmem:[%s2] sm:$0xff]
    %v179 = vld [vmem:[%s2 + $0x8] sm:$0xff]
    %v180 = vld [vmem:[%s2 + $0x10] sm:$0xff]
    %v181 = vld [vmem:[%s2 + $0x18] sm:$0xff]
    %v182 = vadd.f32 %v170, %v178
    %v183 = vadd.f32 %v171, %v179
    %v184 = vadd.f32 %v172, %v180
    %v185 = vadd.f32 %v173, %v181
    %v186 = vadd.f32 %v174, %v178
    %v187 = vadd.f32 %v175, %v179
    %v188 = vadd.f32 %v176, %v180
    %v189 = vadd.f32 %v177, %v181
    %190 = vst [vmem:[#allocation2] sm:$0xff] %v182
    %191 = vst [vmem:[#allocation2 + $0x8] sm:$0xff] %v183
    %192 = vst [vmem:[#allocation2 + $0x10] sm:$0xff] %v184
    %193 = vst [vmem:[#allocation2 + $0x18] sm:$0xff] %v185
    %194 = vst [vmem:[#allocation2 + $0x20] sm:$0xff] %v186
    %195 = vst [vmem:[#allocation2 + $0x28] sm:$0xff] %v187
    %196 = vst [vmem:[#allocation2 + $0x30] sm:$0xff] %v188
    %197 = vst [vmem:[#allocation2 + $0x38] sm:$0xff] %v189
    // Predicated region
    $region14: #{tpu_custom_call.1} parent=1 // pred_check
      _
    $region15: #{tpu_custom_call.1} parent=1 // pred_check_branch
      %199 = sbr.rel (0) target = $region17
    $region16: #{tpu_custom_call.1} parent=1 // pred_region
      %s201 = ssub.s32 1024, 1024
      %202 = vsyncadd [#allocation3], %s201
      %s203 = sshll.u32 [#allocation2], 4
      %s204 = int_to_ptr.vmem [resolvable:$true] %s203
      %209 = dma.vmem_to_hbm [thread:$0]  %s204, 1024, %s3, [#allocation3], 128, 128, 8
    $region17: #{tpu_custom_call.1} parent=1 // pred_fallthru
      _
    // Predicated region
    $region18: #{tpu_custom_call.1} parent=1 // pred_check
      _
    $region19: #{tpu_custom_call.1} parent=1 // pred_check_branch
      %211 = sbr.rel (0) target = $region21
    $region20: #{tpu_custom_call.1} parent=1 // pred_region
      %212 = dma.done [#allocation3], 1024
    $region21: #{tpu_custom_call.1} parent=1 // pred_fallthru
      _
    %213 = vsyncpa [#allocation3], 1

</llo_original>
